<compile_context>
chip_gen: v5e
topology: v5e:2x2
jax: 0.10.0
libtpu: 0.0.40
codegen_flags: <defaults>
</compile_context>

<pallas_src>
import sys
import functools
import operator

import jax
import jax.numpy as jnp
from jax import lax
from jax.experimental import pallas as pl
from jax.experimental.pallas import tpu as pltpu

_EPS = float(sys.float_info.epsilon)        # Python float -> jaxpr literal
_LANES = 128
_DEFAULT_VMEM_BUDGET = 16 * 1024 * 1024     # budget used to size the row tile
_VMEM_LIMIT = 32 * 1024 * 1024              # scoped VMEM limit for Mosaic


def _attention_loss_kernel(*refs, num_head, rows, tile_rows, bpc, acc_rows,
                           need_mask):
    head_refs = refs[:num_head]
    o_ref = refs[num_head]

    r = pl.program_id(1)

    # Sum of heads; cast to f32 in-kernel (avoids a wrapper-side astype pass).
    s = head_refs[0][...].astype(jnp.float32)
    for h_ref in head_refs[1:]:
        s = s + h_ref[...].astype(jnp.float32)
    mean = s * (1.0 / num_head)

    # sum_{i<j} (x_i - x_j)^2 == H * sum_i (x_i - mean)^2   (stable, >= 0)
    d2 = None
    for h_ref in head_refs:
        d = h_ref[...].astype(jnp.float32) - mean
        d2 = d * d if d2 is None else d2 + d * d
    contrib = float(num_head) * d2

    if need_mask:
        # Zero rows past the valid range: partial last block and fully
        # out-of-range (clamped duplicate) blocks of the parallel split.
        # One select on the contribution (NaN-safe vs. stale VMEM garbage).
        gb = pl.program_id(0) * bpc + r            # unclamped global block id
        row_ids = gb * tile_rows + lax.broadcasted_iota(
            jnp.int32, contrib.shape, 0)
        contrib = jnp.where(row_ids < rows, contrib, 0.0)

    # Fold the sublane axis with VPU adds only; the (tiny) cross-lane XLU
    # reduction over the partials happens once, in plain JAX afterwards.
    if acc_rows == 8:
        partial = jnp.sum(contrib.reshape(tile_rows // 8, 8, _LANES), axis=0)
    else:  # tiny full-extent block whose row count is not a multiple of 8
        partial = jnp.sum(contrib, axis=0, keepdims=True)

    # Output block is resident across the "arbitrary" axis -> use it as the
    # accumulator (no scratch needed).
    @pl.when(r == 0)
    def _init():
        o_ref[...] = partial

    @pl.when(r > 0)
    def _accum():
        o_ref[...] += partial


def _pairwise_sq_sum(flat_heads):
    """sum_{i<j} sum((x_i - x_j)^2) via the mean-centred identity (plain JAX)."""
    h = len(flat_heads)
    xs = [f.astype(jnp.float32) for f in flat_heads]
    s = functools.reduce(operator.add, xs)
    mean = s / h
    return h * sum(jnp.sum((x - mean) ** 2) for x in xs)


def attention_loss(heads, *, vmem_budget_bytes=_DEFAULT_VMEM_BUDGET,
                   max_tile_rows=None):
    """heads: list of equally-sized float arrays (NCHW attention maps)."""
    num_head = len(heads)
    if num_head <= 1:
        return jnp.float32(0.0)

    n_valid = int(heads[0].size)
    for h in heads:
        assert int(h.size) == n_valid, "all attention maps must be the same size"
    cnt = num_head * (num_head - 1) // 2

    rows = n_valid // _LANES
    main = rows * _LANES
    tail = n_valid - main

    sq_total = jnp.float32(0.0)

    if rows > 0:
        # ---- row tile from a VMEM budget --------------------------------
        # double-buffered input blocks (native dtype) + ~4 live f32 temporaries
        bytes_per_row = sum(2 * _LANES * h.dtype.itemsize for h in heads)
        bytes_per_row += 4 * _LANES * 4
        cap = max(32, (vmem_budget_bytes // bytes_per_row) // 32 * 32)
        if max_tile_rows is not None:
            cap = max(32, min(cap, max_tile_rows // 32 * 32))

        if rows <= cap:
            if rows > 512:
                # split into >= 2 blocks so the leading "parallel" grid axis
                # can use both TensorCores on v7x (neutral on 1-TC chips)
                tile_rows = min(cap, (pl.cdiv(rows, 2) + 31) // 32 * 32)
            else:
                tile_rows = rows          # full-extent block (always legal)
        else:
            tile_rows = cap               # multiple of 32 -> legal for bf16 too

        num_blocks = pl.cdiv(rows, tile_rows)
        num_par = 2 if num_blocks >= 2 else 1
        bpc = pl.cdiv(num_blocks, num_par)           # blocks per parallel slice
        need_mask = (num_par * bpc * tile_rows) != rows
        acc_rows = 8 if tile_rows % 8 == 0 else 1
        last_block = num_blocks - 1

        # ravel + reshape is a metadata-only view when n % 128 == 0; only the
        # sub-128-element tail (if any) is peeled off for the JAX epilogue.
        mains = []
        for h in heads:
            flat = jnp.ravel(h)
            if tail:
                flat = flat[:main]
            mains.append(flat.reshape(rows, _LANES))

        def in_index_map(p, r):
            # clamp so duplicate trailing blocks of the parallel split never
            # DMA out of bounds; their contribution is masked to zero in-kernel
            return (jnp.minimum(p * bpc + r, last_block), 0)

        kernel = functools.partial(
            _attention_loss_kernel,
            num_head=num_head, rows=rows, tile_rows=tile_rows,
            bpc=bpc, acc_rows=acc_rows, need_mask=need_mask)

        partials = pl.pallas_call(
            kernel,
            out_shape=jax.ShapeDtypeStruct((num_par * acc_rows, _LANES),
                                           jnp.float32),
            grid=(num_par, bpc),
            in_specs=[pl.BlockSpec((tile_rows, _LANES), in_index_map)
                      for _ in heads],
            out_specs=pl.BlockSpec((acc_rows, _LANES), lambda p, r: (p, 0)),
            compiler_params=pltpu.CompilerParams(
                dimension_semantics=("parallel", "arbitrary"),
                vmem_limit_bytes=_VMEM_LIMIT),
        )(*mains)

        sq_total = sq_total + jnp.sum(partials)

    if tail > 0:
        # sub-128-element remainder: negligible work, done in plain JAX so the
        # kernel inputs stay copy-free views.
        tails = [jnp.ravel(h)[main:] for h in heads]
        sq_total = sq_total + _pairwise_sq_sum(tails)

    mse_sum = sq_total / jnp.float32(n_valid)   # == sum_{i<j} MSE(x_i, x_j)
    return jnp.float32(cnt) / (mse_sum + jnp.float32(_EPS))


def _reference(heads):
    num_head = len(heads)
    loss = jnp.float32(0.0)
    cnt = 0
    for i in range(num_head - 1):
        for j in range(i + 1, num_head):
            d = heads[i].astype(jnp.float32) - heads[j].astype(jnp.float32)
            loss = loss + jnp.mean(d * d)
            cnt += 1
    if cnt == 0:
        return jnp.float32(0.0)
    return jnp.float32(cnt) / (loss + jnp.float32(_EPS))


if __name__ == "__main__":
    key = jax.random.PRNGKey(0)

    # 1) Small DDAMFN-like case: 4 heads of (B=2, C=4, H=8, W=16), f32.
    num_head = 4
    B, C, H, W = 2, 4, 8, 16
    keys = jax.random.split(key, num_head)
    heads = [jax.random.normal(k, (B, C, H, W), dtype=jnp.float32)
             for k in keys]
    result = attention_loss(heads)
    jax.block_until_ready(result)
    ref = _reference(heads)
    assert jnp.allclose(result, ref, rtol=1e-4, atol=1e-5), (result, ref)

    # 2) Multi-block + dual-TC parallel split + partial last block masking:
    #    3 heads of (2, 4, 100, 100) -> 80000 elems -> 625 rows -> 2 blocks.
    keys2 = jax.random.split(jax.random.PRNGKey(1), 3)
    heads2 = [jax.random.normal(k, (2, 4, 100, 100), dtype=jnp.float32)
              for k in keys2]
    result2 = attention_loss(heads2)
    jax.block_until_ready(result2)
    ref2 = _reference(heads2)
    assert jnp.allclose(result2, ref2, rtol=1e-4, atol=1e-5), (result2, ref2)

    # 3) Same data, forced small tiles -> 5 blocks, 2 parallel slices of 3
    #    (exercises the clamped duplicate-block path + masking).
    result3 = attention_loss(heads2, max_tile_rows=128)
    jax.block_until_ready(result3)
    assert jnp.allclose(result3, ref2, rtol=1e-4, atol=1e-5), (result3, ref2)

    # 4) Size not divisible by 128 -> copy-free main view + JAX tail epilogue.
    keys4 = jax.random.split(jax.random.PRNGKey(2), 2)
    heads4 = [jax.random.normal(k, (2, 3, 7, 11), dtype=jnp.float32)
              for k in keys4]
    result4 = attention_loss(heads4)
    jax.block_until_ready(result4)
    ref4 = _reference(heads4)
    assert jnp.allclose(result4, ref4, rtol=1e-4, atol=1e-5), (result4, ref4)

    # 5) bf16 inputs: native-dtype blocks, cast to f32 inside the kernel.
    keys5 = jax.random.split(jax.random.PRNGKey(3), 4)
    heads5 = [jax.random.normal(k, (2, 4, 16, 16), dtype=jnp.bfloat16)
              for k in keys5]
    result5 = attention_loss(heads5)
    jax.block_until_ready(result5)
    ref5 = _reference(heads5)
    assert jnp.allclose(result5, ref5, rtol=1e-3, atol=1e-5), (result5, ref5)

    # 6) Near-identical heads (the high-loss regime): the mean-centred form
    #    must not blow up from cancellation.
    base = jax.random.normal(jax.random.PRNGKey(4), (2, 4, 32, 32),
                             dtype=jnp.float32)
    nkeys = jax.random.split(jax.random.PRNGKey(5), 4)
    heads6 = [base + 1e-2 * jax.random.normal(k, base.shape, dtype=jnp.float32)
              for k in nkeys]
    result6 = attention_loss(heads6)
    jax.block_until_ready(result6)
    ref6 = _reference(heads6)
    assert jnp.allclose(result6, ref6, rtol=2e-3, atol=0.0), (result6, ref6)

    # 7) Single head -> loss is 0 (matches the PyTorch else-branch).
    assert float(attention_loss([heads[0]])) == 0.0

    print("KERNEL_OK")
</pallas_src>

<mosaic_0001>
module attributes {stable_mosaic.version = 11 : i64} {
  func.func @_attention_loss_kernel(%arg0: i32, %arg1: i32, %arg2: memref<8x128xf32, #tpu.memory_space<vmem>>, %arg3: memref<8x128xf32, #tpu.memory_space<vmem>>, %arg4: memref<8x128xf32, #tpu.memory_space<vmem>>, %arg5: memref<8x128xf32, #tpu.memory_space<vmem>>, %arg6: memref<8x128xf32, #tpu.memory_space<vmem>>) attributes {dimension_semantics = [#tpu.dimension_semantics<parallel>, #tpu.dimension_semantics<arbitrary>], iteration_bounds = array<i64: 1, 1>, scalar_prefetch = 0 : i64, scratch_operands = 0 : i64, tpu.core_type = #tpu.core_type<tc>, window_params = [{transform_indices = @transform_0, window_bounds = array<i64: 8, 128>}, {transform_indices = @transform_1, window_bounds = array<i64: 8, 128>}, {transform_indices = @transform_2, window_bounds = array<i64: 8, 128>}, {transform_indices = @transform_3, window_bounds = array<i64: 8, 128>}, {transform_indices = @transform_4, window_bounds = array<i64: 8, 128>}]} {
    %c0 = arith.constant 0 : index
    %c0_0 = arith.constant 0 : index
    %0 = vector.load %arg2[%c0, %c0_0] : memref<8x128xf32, #tpu.memory_space<vmem>>, vector<8x128xf32>
    %c0_1 = arith.constant 0 : index
    %c0_2 = arith.constant 0 : index
    %1 = vector.load %arg3[%c0_1, %c0_2] : memref<8x128xf32, #tpu.memory_space<vmem>>, vector<8x128xf32>
    %2 = arith.addf %0, %1 : vector<8x128xf32>
    %c0_3 = arith.constant 0 : index
    %c0_4 = arith.constant 0 : index
    %3 = vector.load %arg4[%c0_3, %c0_4] : memref<8x128xf32, #tpu.memory_space<vmem>>, vector<8x128xf32>
    %4 = arith.addf %2, %3 : vector<8x128xf32>
    %c0_5 = arith.constant 0 : index
    %c0_6 = arith.constant 0 : index
    %5 = vector.load %arg5[%c0_5, %c0_6] : memref<8x128xf32, #tpu.memory_space<vmem>>, vector<8x128xf32>
    %6 = arith.addf %4, %5 : vector<8x128xf32>
    %cst = arith.constant 2.500000e-01 : f32
    %7 = vector.broadcast %cst : f32 to vector<8x128xf32>
    %8 = arith.mulf %6, %7 : vector<8x128xf32>
    %c0_7 = arith.constant 0 : index
    %c0_8 = arith.constant 0 : index
    %9 = vector.load %arg2[%c0_7, %c0_8] : memref<8x128xf32, #tpu.memory_space<vmem>>, vector<8x128xf32>
    %10 = arith.subf %9, %8 : vector<8x128xf32>
    %11 = arith.mulf %10, %10 : vector<8x128xf32>
    %c0_9 = arith.constant 0 : index
    %c0_10 = arith.constant 0 : index
    %12 = vector.load %arg3[%c0_9, %c0_10] : memref<8x128xf32, #tpu.memory_space<vmem>>, vector<8x128xf32>
    %13 = arith.subf %12, %8 : vector<8x128xf32>
    %14 = arith.mulf %13, %13 : vector<8x128xf32>
    %15 = arith.addf %11, %14 : vector<8x128xf32>
    %c0_11 = arith.constant 0 : index
    %c0_12 = arith.constant 0 : index
    %16 = vector.load %arg4[%c0_11, %c0_12] : memref<8x128xf32, #tpu.memory_space<vmem>>, vector<8x128xf32>
    %17 = arith.subf %16, %8 : vector<8x128xf32>
    %18 = arith.mulf %17, %17 : vector<8x128xf32>
    %19 = arith.addf %15, %18 : vector<8x128xf32>
    %c0_13 = arith.constant 0 : index
    %c0_14 = arith.constant 0 : index
    %20 = vector.load %arg5[%c0_13, %c0_14] : memref<8x128xf32, #tpu.memory_space<vmem>>, vector<8x128xf32>
    %21 = arith.subf %20, %8 : vector<8x128xf32>
    %22 = arith.mulf %21, %21 : vector<8x128xf32>
    %23 = arith.addf %19, %22 : vector<8x128xf32>
    %cst_15 = arith.constant 4.000000e+00 : f32
    %24 = vector.broadcast %cst_15 : f32 to vector<8x128xf32>
    %25 = arith.mulf %24, %23 : vector<8x128xf32>
    %26 = vector.shape_cast %25 : vector<8x128xf32> to vector<1x8x128xf32>
    %cst_16 = arith.constant dense<0.000000e+00> : vector<8x128xf32>
    %27 = vector.multi_reduction <add>, %26, %cst_16 [0] : vector<1x8x128xf32> to vector<8x128xf32>
    %c0_i32 = arith.constant 0 : i32
    %28 = arith.cmpi eq, %arg1, %c0_i32 : i32
    %29 = arith.extui %28 : i1 to i32
    %c0_i32_17 = arith.constant 0 : i32
    %30 = arith.cmpi ne, %29, %c0_i32_17 : i32
    scf.if %30 {
      %c0_20 = arith.constant 0 : index
      %c0_21 = arith.constant 0 : index
      %34 = vector.load %arg6[%c0_20, %c0_21] : memref<8x128xf32, #tpu.memory_space<vmem>>, vector<8x128xf32>
      tpu.vector_store %arg6[%c0_20, %c0_21], %27 {strides = array<i32>} : memref<8x128xf32, #tpu.memory_space<vmem>>, vector<8x128xf32>,
    } else {
    }
    %c0_i32_18 = arith.constant 0 : i32
    %31 = arith.cmpi sgt, %arg1, %c0_i32_18 : i32
    %32 = arith.extui %31 : i1 to i32
    %c0_i32_19 = arith.constant 0 : i32
    %33 = arith.cmpi ne, %32, %c0_i32_19 : i32
    scf.if %33 {
      %c0_20 = arith.constant 0 : index
      %c0_21 = arith.constant 0 : index
      %34 = vector.load %arg6[%c0_20, %c0_21] : memref<8x128xf32, #tpu.memory_space<vmem>>, vector<8x128xf32>
      %35 = arith.addf %34, %27 : vector<8x128xf32>
      %c0_22 = arith.constant 0 : index
      %c0_23 = arith.constant 0 : index
      %36 = vector.load %arg6[%c0_22, %c0_23] : memref<8x128xf32, #tpu.memory_space<vmem>>, vector<8x128xf32>
      tpu.vector_store %arg6[%c0_22, %c0_23], %35 {strides = array<i32>} : memref<8x128xf32, #tpu.memory_space<vmem>>, vector<8x128xf32>,
    } else {
    }
    return
  }
  func.func @transform_0(%arg0: i32, %arg1: i32) -> (i32, i32) {
    %c1_i32 = arith.constant 1 : i32
    %0 = arith.muli %arg0, %c1_i32 : i32
    %1 = arith.addi %0, %arg1 : i32
    %c0_i32 = arith.constant 0 : i32
    %2 = arith.minsi %1, %c0_i32 : i32
    %c0_i32_0 = arith.constant 0 : i32
    %c0_i32_1 = arith.constant 0 : i32
    return %2, %c0_i32_0 : i32, i32
  }
  func.func @transform_1(%arg0: i32, %arg1: i32) -> (i32, i32) {
    %c1_i32 = arith.constant 1 : i32
    %0 = arith.muli %arg0, %c1_i32 : i32
    %1 = arith.addi %0, %arg1 : i32
    %c0_i32 = arith.constant 0 : i32
    %2 = arith.minsi %1, %c0_i32 : i32
    %c0_i32_0 = arith.constant 0 : i32
    %c0_i32_1 = arith.constant 0 : i32
    return %2, %c0_i32_0 : i32, i32
  }
  func.func @transform_2(%arg0: i32, %arg1: i32) -> (i32, i32) {
    %c1_i32 = arith.constant 1 : i32
    %0 = arith.muli %arg0, %c1_i32 : i32
    %1 = arith.addi %0, %arg1 : i32
    %c0_i32 = arith.constant 0 : i32
    %2 = arith.minsi %1, %c0_i32 : i32
    %c0_i32_0 = arith.constant 0 : i32
    %c0_i32_1 = arith.constant 0 : i32
    return %2, %c0_i32_0 : i32, i32
  }
  func.func @transform_3(%arg0: i32, %arg1: i32) -> (i32, i32) {
    %c1_i32 = arith.constant 1 : i32
    %0 = arith.muli %arg0, %c1_i32 : i32
    %1 = arith.addi %0, %arg1 : i32
    %c0_i32 = arith.constant 0 : i32
    %2 = arith.minsi %1, %c0_i32 : i32
    %c0_i32_0 = arith.constant 0 : i32
    %c0_i32_1 = arith.constant 0 : i32
    return %2, %c0_i32_0 : i32, i32
  }
  func.func @transform_4(%arg0: i32, %arg1: i32) -> (i32, i32) {
    %c0_i32 = arith.constant 0 : i32
    %c0_i32_0 = arith.constant 0 : i32
    return %arg0, %c0_i32 : i32, i32
  }
}

</mosaic_0001>

<llo_original>
// kernel: tpu_custom_call.1
$region0: #{tpu_custom_call.1}
  #allocation0 [shape = 'u32[]', space=smem, size = 0x4, offset = 0x4, fixed_abs, tag = 'smem constant byte address 0x4 - core index']
  #allocation1 [shape = 'u32[72,128]{1,0:T(1,128)}', space=vmem, size = 0x9000, scoped, tag = 'internal scratch']
  %s0 = inlined_call_operand.hbm [shape: f32[8,128], index: 0, kind: input, shape index: {}]
  %s1 = inlined_call_operand.hbm [shape: f32[8,128], index: 1, kind: input, shape index: {}]
  %s2 = inlined_call_operand.hbm [shape: f32[8,128], index: 2, kind: input, shape index: {}]
  %s3 = inlined_call_operand.hbm [shape: f32[8,128], index: 3, kind: input, shape index: {}]
  %s4 = inlined_call_operand.hbm [shape: f32[8,128], index: 4, kind: output, shape index: {}]
  %s5 = sld [smem:[#allocation0]]
  $region50: #{tpu_custom_call.1} parent=0
    _
  %s7 = ssub.s32 1, %s5
  %s8 = scalar_select 0, %s7, %s5
  $region1: #{tpu_custom_call.1} parent=0
    #allocation2 [shape = 'u8[4096]{0}', space=vmem, size = 0x1000, scoped, tag = 'input window, operand 0, single buffered']
    #allocation3 [shape = 's32[1]{0}', space=sflag, size = 0x4, scoped, tag = 'scoped memory for tpu_custom_call.1']
    #allocation4 [shape = 's32[1]{0}', space=sflag, size = 0x4, scoped, tag = 'scoped memory for tpu_custom_call.1']
    #allocation5 [shape = 'u8[4096]{0}', space=vmem, size = 0x1000, scoped, tag = 'input window, operand 1, single buffered']
    #allocation6 [shape = 's32[1]{0}', space=sflag, size = 0x4, scoped, tag = 'scoped memory for tpu_custom_call.1']
    #allocation7 [shape = 'u8[4096]{0}', space=vmem, size = 0x1000, scoped, tag = 'input window, operand 2, single buffered']
    #allocation8 [shape = 'u8[4096]{0}', space=vmem, size = 0x1000, scoped, tag = 'input window, operand 3, single buffered']
    #allocation9 [shape = 's32[1]{0}', space=sflag, size = 0x4, scoped, tag = 'scoped memory for tpu_custom_call.1']
    #allocation10 [shape = 'u8[4096]{0}', space=vmem, size = 0x1000, scoped, tag = 'output window, operand 0, single buffered']
    %9 = vsyncpa [#allocation3], 0
    %10 = vsyncpa [#allocation6], 0
    %11 = vsyncpa [#allocation9], 0
    %12 = vsyncpa [#allocation4], 0
    // Predicated region
    $region2: #{tpu_custom_call.1} parent=1 // pred_check
      _
    $region3: #{tpu_custom_call.1} parent=1 // pred_check_branch
      %14 = sbr.rel (0) target = $region5
    $region4: #{tpu_custom_call.1} parent=1 // pred_region
      %s15 = sadd.s32 0, 0
      %p16 = scmp.lt.s32.totalorder %s15, 0
      %s17 = scalar_select %p16, %s15, 0
      %19 = vsyncadd [#allocation3], 0
      %s20 = smul.addr %s17, 8
      %s21 = scalar_lea.hbm %s0, %s20
      %s23 = sshll.u32 %s21, 4
      %s24 = int_to_ptr.hbm [resolvable:$true] %s23
      %s25 = sshll.u32 [#allocation2], 4
      %s26 = int_to_ptr.vmem [resolvable:$true] %s25
      %28 = dma.hbm_to_vmem [thread:$0]  %s24, 128, %s26, [#allocation3]
    $region5: #{tpu_custom_call.1} parent=1 // pred_fallthru
      _
    // Predicated region
    $region6: #{tpu_custom_call.1} parent=1 // pred_check
      _
    $region7: #{tpu_custom_call.1} parent=1 // pred_check_branch
      %30 = sbr.rel (0) target = $region9
    $region8: #{tpu_custom_call.1} parent=1 // pred_region
      %s31 = sadd.s32 0, 0
      %p32 = scmp.lt.s32.totalorder %s31, 0
      %s33 = scalar_select %p32, %s31, 0
      %35 = vsyncadd [#allocation6], 0
      %s36 = smul.addr %s33, 8
      %s37 = scalar_lea.hbm %s1, %s36
      %s39 = sshll.u32 %s37, 4
      %s40 = int_to_ptr.hbm [resolvable:$true] %s39
      %s41 = sshll.u32 [#allocation5], 4
      %s42 = int_to_ptr.vmem [resolvable:$true] %s41
      %44 = dma.hbm_to_vmem [thread:$0]  %s40, 128, %s42, [#allocation6]
    $region9: #{tpu_custom_call.1} parent=1 // pred_fallthru
      _
    // Predicated region
    $region10: #{tpu_custom_call.1} parent=1 // pred_check
      _
    $region11: #{tpu_custom_call.1} parent=1 // pred_check_branch
      %46 = sbr.rel (0) target = $region13
    $region12: #{tpu_custom_call.1} parent=1 // pred_region
      %s47 = sadd.s32 0, 0
      %p48 = scmp.lt.s32.totalorder %s47, 0
      %s49 = scalar_select %p48, %s47, 0
      %51 = vsyncadd [#allocation6], 0
      %s52 = smul.addr %s49, 8
      %s53 = scalar_lea.hbm %s2, %s52
      %s55 = sshll.u32 %s53, 4
      %s56 = int_to_ptr.hbm [resolvable:$true] %s55
      %s57 = sshll.u32 [#allocation7], 4
      %s58 = int_to_ptr.vmem [resolvable:$true] %s57
      %60 = dma.hbm_to_vmem [thread:$0]  %s56, 128, %s58, [#allocation6]
    $region13: #{tpu_custom_call.1} parent=1 // pred_fallthru
      _
    // Predicated region
    $region14: #{tpu_custom_call.1} parent=1 // pred_check
      _
    $region15: #{tpu_custom_call.1} parent=1 // pred_check_branch
      %62 = sbr.rel (0) target = $region17
    $region16: #{tpu_custom_call.1} parent=1 // pred_region
      %s63 = sadd.s32 0, 0
      %p64 = scmp.lt.s32.totalorder %s63, 0
      %s65 = scalar_select %p64, %s63, 0
      %67 = vsyncadd [#allocation9], 0
      %s68 = smul.addr %s65, 8
      %s69 = scalar_lea.hbm %s3, %s68
      %s71 = sshll.u32 %s69, 4
      %s72 = int_to_ptr.hbm [resolvable:$true] %s71
      %s73 = sshll.u32 [#allocation8], 4
      %s74 = int_to_ptr.vmem [resolvable:$true] %s73
      %76 = dma.hbm_to_vmem [thread:$0]  %s72, 128, %s74, [#allocation9]
    $region17: #{tpu_custom_call.1} parent=1 // pred_fallthru
      _
    // Predicated region
    $region18: #{tpu_custom_call.1} parent=1 // pred_check
      _
    $region19: #{tpu_custom_call.1} parent=1 // pred_check_branch
      %78 = sbr.rel (0) target = $region21
    $region20: #{tpu_custom_call.1} parent=1 // pred_region
      %80 = dma.done [#allocation3], 128
    $region21: #{tpu_custom_call.1} parent=1 // pred_fallthru
      _
    // Predicated region
    $region22: #{tpu_custom_call.1} parent=1 // pred_check
      _
    $region23: #{tpu_custom_call.1} parent=1 // pred_check_branch
      %82 = sbr.rel (0) target = $region25
    $region24: #{tpu_custom_call.1} parent=1 // pred_region
      %84 = dma.done [#allocation6], 128
    $region25: #{tpu_custom_call.1} parent=1 // pred_fallthru
      _
    // Predicated region
    $region26: #{tpu_custom_call.1} parent=1 // pred_check
      _
    $region27: #{tpu_custom_call.1} parent=1 // pred_check_branch
      %86 = sbr.rel (0) target = $region29
    $region28: #{tpu_custom_call.1} parent=1 // pred_region
      %88 = dma.done [#allocation6], 128
    $region29: #{tpu_custom_call.1} parent=1 // pred_fallthru
      _
    // Predicated region
    $region30: #{tpu_custom_call.1} parent=1 // pred_check
      _
    $region31: #{tpu_custom_call.1} parent=1 // pred_check_branch
      %90 = sbr.rel (0) target = $region33
    $region32: #{tpu_custom_call.1} parent=1 // pred_region
      %92 = dma.done [#allocation9], 128
    $region33: #{tpu_custom_call.1} parent=1 // pred_fallthru
      _
    %s93 = sadd.s32 0, 0
    %p94 = scmp.lt.s32.totalorder %s93, 0
    %s95 = scalar_select %p94, %s93, 0
    %s96 = sadd.s32 0, 0
    %p97 = scmp.lt.s32.totalorder %s96, 0
    %s98 = scalar_select %p97, %s96, 0
    %s99 = sadd.s32 0, 0
    %p100 = scmp.lt.s32.totalorder %s99, 0
    %s101 = scalar_select %p100, %s99, 0
    %s102 = sadd.s32 0, 0
    %p103 = scmp.lt.s32.totalorder %s102, 0
    %s104 = scalar_select %p103, %s102, 0
    %v105 = vld [vmem:[#allocation2] sm:$0xff]
    %v106 = vld [vmem:[#allocation5] sm:$0xff]
    %v107 = vadd.f32 %v105, %v106
    %v108 = vld [vmem:[#allocation7] sm:$0xff]
    %v109 = vadd.f32 %v107, %v108
    %v110 = vld [vmem:[#allocation8] sm:$0xff]
    %v111 = vadd.f32 %v109, %v110
    %v112 = vmul.f32 %v111, 0.25
    %v113 = vsub.f32 %v105, %v112
    %v114 = vmul.f32 %v113, %v113
    %v115 = vsub.f32 %v106, %v112
    %v116 = vmul.f32 %v115, %v115
    %v117 = vadd.f32 %v114, %v116
    %v118 = vsub.f32 %v108, %v112
    %v119 = vmul.f32 %v118, %v118
    %v120 = vadd.f32 %v117, %v119
    %v121 = vsub.f32 %v110, %v112
    %v122 = vmul.f32 %v121, %v121
    %v123 = vadd.f32 %v120, %v122
    %v124 = vmul.f32 %v123, 4.0
    %v125 = vadd.f32 %v124, 0.0
    %p126 = scmp.eq.s32.totalorder 0, 0
    // Predicated region
    $region34: #{tpu_custom_call.1} parent=1 // pred_check
      %p127 = pneg %p126
    $region35: #{tpu_custom_call.1} parent=1 // pred_check_branch
      %129 = sbr.rel (%p127) target = $region37
    $region36: #{tpu_custom_call.1} parent=1 // pred_region
      %130 = vst [vmem:[#allocation10] sm:$0xff] %v125
    $region37: #{tpu_custom_call.1} parent=1 // pred_fallthru
      _
    %p131 = scmp.gt.s32.totalorder 0, 0
    // Predicated region
    $region38: #{tpu_custom_call.1} parent=1 // pred_check
      %p132 = pneg %p131
    $region39: #{tpu_custom_call.1} parent=1 // pred_check_branch
      %134 = sbr.rel (%p132) target = $region41
    $region40: #{tpu_custom_call.1} parent=1 // pred_region
      %v135 = vld [vmem:[#allocation10] sm:$0xff]
      %v136 = vadd.f32 %v135, %v125
      %137 = vst [vmem:[#allocation10] sm:$0xff] %v136
    $region41: #{tpu_custom_call.1} parent=1 // pred_fallthru
      _
    // Predicated region
    $region42: #{tpu_custom_call.1} parent=1 // pred_check
      _
    $region43: #{tpu_custom_call.1} parent=1 // pred_check_branch
      %139 = sbr.rel (0) target = $region45
    $region44: #{tpu_custom_call.1} parent=1 // pred_region
      %141 = vsyncadd [#allocation4], 0
      %s143 = sshll.u32 [#allocation10], 4
      %s144 = int_to_ptr.vmem [resolvable:$true] %s143
      %s145 = sshll.u32 %s4, 4
      %s146 = int_to_ptr.hbm [resolvable:$true] %s145
      %148 = dma.vmem_to_hbm [thread:$0]  %s144, 128, %s146, [#allocation4]
    $region45: #{tpu_custom_call.1} parent=1 // pred_fallthru
      _
    // Predicated region
    $region46: #{tpu_custom_call.1} parent=1 // pred_check
      _
    $region47: #{tpu_custom_call.1} parent=1 // pred_check_branch
      %150 = sbr.rel (0) target = $region49
    $region48: #{tpu_custom_call.1} parent=1 // pred_region
      %152 = dma.done [#allocation4], 128
    $region49: #{tpu_custom_call.1} parent=1 // pred_fallthru
      _
    %153 = vsyncpa [#allocation3], 1
    %154 = vsyncpa [#allocation6], 1
    %155 = vsyncpa [#allocation9], 1
    %156 = vsyncpa [#allocation4], 1

</llo_original>
